<compile_context>
chip_gen: v6e
topology: v6e:2x2x1
jax: 0.10.0
libtpu: 0.0.40
codegen_flags: <defaults>
</compile_context>

<pallas_src>
import functools

import jax
import jax.numpy as jnp
from jax.experimental import pallas as pl
from jax.experimental.pallas import tpu as pltpu


# ---------------------------------------------------------------------------
# Kernel
# ---------------------------------------------------------------------------
def noisy_linear_kernel(x_ref, ein_ref, wmu_ref, wsig_ref, eout_ref, b_ref,
                        o_ref):
    k = pl.program_id(2)

    # Output tile is resident across k (same (i, j) block): init with the
    # pre-combined bias, then accumulate in f32 directly in o_ref.
    @pl.when(k == 0)
    def _():
        o_ref[...] = jnp.broadcast_to(b_ref[...], o_ref.shape)

    x = x_ref[...]                                           # (tm, tk) f32

    # mu path: bf16 MXU contraction, f32 accumulation.
    mu = jnp.dot(x.astype(jnp.bfloat16), wmu_ref[...],
                 preferred_element_type=jnp.float32)

    # sigma path via the factorized-noise identity:
    #   (x * eps_in) @ W_sigma, scaled per-column by eps_out.
    xs = (x * ein_ref[...]).astype(jnp.bfloat16)             # (tm,tk)*(1,tk)
    sg = jnp.dot(xs, wsig_ref[...], preferred_element_type=jnp.float32)

    o_ref[...] += mu + sg * eout_ref[...]


# ---------------------------------------------------------------------------
# Tiling plan (static) + one-time operand preparation (pad/cast ONCE)
# ---------------------------------------------------------------------------
def _round_up(x, m):
    return ((x + m - 1) // m) * m


def plan_noisy_linear(batch_hint, in_features, out_features,
                      *, tm_max=512, tn_max=512, tk_max=1024):
    """Pick static tile sizes + padded weight dims for this layer."""
    tm = min(tm_max, _round_up(batch_hint, 8))
    tk = min(tk_max, _round_up(in_features, 128))
    tn = min(tn_max, _round_up(out_features, 128))
    # If the batch fits a single M tile, keep >=2 tiles along N so the second
    # TensorCore (v7x) has work on a "parallel" axis.
    if _round_up(batch_hint, tm) // tm == 1 and out_features >= 256:
        tn = min(tn, _round_up((out_features + 1) // 2, 128))
    Kp = _round_up(in_features, tk)
    Np = _round_up(out_features, tn)
    return {"tm": tm, "tn": tn, "tk": tk, "Kp": Kp, "Np": Np}


def prepare_noisy_linear_operands(weight_mu_kn, weight_sigma_kn, eps_in,
                                  eps_out, bias_mu, bias_sigma, bias_epsilon,
                                  plan):
    """Pad + cast weights once (call after reset_noise, not per forward)."""
    K, N = weight_mu_kn.shape
    Kp, Np = plan["Kp"], plan["Np"]
    wmu = jnp.pad(weight_mu_kn, ((0, Kp - K), (0, Np - N))).astype(jnp.bfloat16)
    wsig = jnp.pad(weight_sigma_kn, ((0, Kp - K), (0, Np - N))).astype(jnp.bfloat16)
    ein = jnp.pad(eps_in, (0, Kp - K)).reshape(1, Kp).astype(jnp.float32)
    eout = jnp.pad(eps_out, (0, Np - N)).reshape(1, Np).astype(jnp.float32)
    bias = jnp.pad(bias_mu + bias_sigma * bias_epsilon,
                   (0, Np - N)).reshape(1, Np).astype(jnp.float32)
    return wmu, wsig, ein, eout, bias


# ---------------------------------------------------------------------------
# Forward wrapper
# ---------------------------------------------------------------------------
@functools.partial(jax.jit,
                   static_argnames=("out_features", "tm", "tn", "tk"))
def noisy_linear_forward(x, wmu_p, wsig_p, ein_p, eout_p, bias_p,
                         *, out_features, tm, tn, tk):
    """Training-mode NoisyLinear forward.

    x:      (B, K) f32
    wmu_p / wsig_p: (Kp, Np) bf16  pre-padded (K, N)-layout weights
    ein_p:  (1, Kp) f32, eout_p / bias_p: (1, Np) f32
    returns (B, out_features) f32
    """
    B, K = x.shape
    Kp, Np = wmu_p.shape
    Mp = _round_up(B, tm)
    if (Mp, Kp) != (B, K):
        x = jnp.pad(x, ((0, Mp - B), (0, Kp - K)))

    grid = (Mp // tm, Np // tn, Kp // tk)

    out = pl.pallas_call(
        noisy_linear_kernel,
        out_shape=jax.ShapeDtypeStruct((Mp, Np), jnp.float32),
        grid_spec=pltpu.PrefetchScalarGridSpec(
            num_scalar_prefetch=0,
            grid=grid,
            in_specs=[
                pl.BlockSpec((tm, tk), lambda i, j, k: (i, k)),   # x
                pl.BlockSpec((1, tk), lambda i, j, k: (0, k)),    # eps_in row
                pl.BlockSpec((tk, tn), lambda i, j, k: (k, j)),   # W_mu (bf16)
                pl.BlockSpec((tk, tn), lambda i, j, k: (k, j)),   # W_sigma (bf16)
                pl.BlockSpec((1, tn), lambda i, j, k: (0, j)),    # eps_out row
                pl.BlockSpec((1, tn), lambda i, j, k: (0, j)),    # combined bias
            ],
            out_specs=pl.BlockSpec((tm, tn), lambda i, j, k: (i, j)),
        ),
        compiler_params=pltpu.CompilerParams(
            dimension_semantics=("parallel", "parallel", "arbitrary"),
            vmem_limit_bytes=32 * 1024 * 1024),
    )(x, ein_p, wmu_p, wsig_p, eout_p, bias_p)

    return out[:B, :out_features]

# TODO(synk): eval-mode forward (weight = mu, bias = mu) should use a
# dedicated mu-only kernel that skips the W_sigma / eps streams entirely.


# ---------------------------------------------------------------------------
# Parameter / noise construction (plain-JAX glue, matches PyTorch init)
# ---------------------------------------------------------------------------
def f_epsilon(key, size):
    x = jax.random.normal(key, (size,), dtype=jnp.float32)
    return jnp.sign(x) * jnp.sqrt(jnp.abs(x))


def make_noisy_linear_params(key, in_features, out_features, sigma_init=0.5):
    """Weights in (in, out) layout, factorized noise (never materialized)."""
    std = 1.0 / (in_features ** 0.5)
    k_wmu, k_bmu, k_ein, k_eout = jax.random.split(key, 4)
    weight_mu = jax.random.uniform(
        k_wmu, (out_features, in_features), jnp.float32,
        minval=-std, maxval=std).T
    weight_sigma = jnp.full((in_features, out_features), sigma_init * std,
                            dtype=jnp.float32)
    bias_mu = jax.random.uniform(
        k_bmu, (out_features,), jnp.float32, minval=-std, maxval=std)
    bias_sigma = jnp.full((out_features,), sigma_init * std, dtype=jnp.float32)
    eps_in = f_epsilon(k_ein, in_features)
    eps_out = f_epsilon(k_eout, out_features)
    bias_epsilon = eps_out
    return (weight_mu, weight_sigma, eps_in, eps_out,
            bias_mu, bias_sigma, bias_epsilon)


# ---------------------------------------------------------------------------
# References
# ---------------------------------------------------------------------------
def _reference_bf16(x, wmu_kn, wsig_kn, eps_in, eps_out, bmu, bsig, beps):
    """Same bf16-weight / f32-accumulate arithmetic as the kernel."""
    wmu = wmu_kn.astype(jnp.bfloat16).astype(jnp.float32)
    wsig = wsig_kn.astype(jnp.bfloat16).astype(jnp.float32)
    xb = x.astype(jnp.bfloat16).astype(jnp.float32)
    xs = (x * eps_in).astype(jnp.bfloat16).astype(jnp.float32)
    mu = jnp.dot(xb, wmu, precision=jax.lax.Precision.HIGHEST)
    sg = jnp.dot(xs, wsig, precision=jax.lax.Precision.HIGHEST)
    return mu + sg * eps_out + (bmu + bsig * beps)


def _reference_f32(x, wmu_kn, wsig_kn, eps_in, eps_out, bmu, bsig, beps):
    """Bit-for-bit PyTorch semantics (full f32 weights)."""
    w = wmu_kn + wsig_kn * jnp.outer(eps_in, eps_out)
    return jnp.dot(x, w, precision=jax.lax.Precision.HIGHEST) + (bmu + bsig * beps)


# ---------------------------------------------------------------------------
# Demo / self-check
# ---------------------------------------------------------------------------
if __name__ == "__main__":
    key = jax.random.PRNGKey(0)
    k1, kx1, k2, kx2 = jax.random.split(key, 4)

    # 1) Small DQN-head shape (single-tile path, padded to 128 lanes).
    B1, K1, N1 = 8, 32, 32
    params1 = make_noisy_linear_params(k1, K1, N1, sigma_init=0.5)
    plan1 = plan_noisy_linear(B1, K1, N1)
    ops1 = prepare_noisy_linear_operands(*params1, plan1)          # pad ONCE
    x1 = jax.random.normal(kx1, (B1, K1), dtype=jnp.float32)
    y1 = jax.block_until_ready(
        noisy_linear_forward(x1, *ops1, out_features=N1,
                             tm=plan1["tm"], tn=plan1["tn"], tk=plan1["tk"]))
    assert y1.shape == (B1, N1)
    assert jnp.allclose(y1, _reference_bf16(x1, *params1), atol=2e-3, rtol=2e-3)
    assert jnp.allclose(y1, _reference_f32(x1, *params1), atol=5e-2, rtol=5e-2)

    # 2) Multi-tile shape: exercises (M, N, K) grid, K-accumulation into the
    #    resident output tile, and K/N padding (small tile caps force >1 step).
    B2, K2, N2 = 48, 640, 384
    params2 = make_noisy_linear_params(k2, K2, N2, sigma_init=0.5)
    plan2 = plan_noisy_linear(B2, K2, N2, tn_max=128, tk_max=256)
    ops2 = prepare_noisy_linear_operands(*params2, plan2)          # pad ONCE
    x2 = jax.random.normal(kx2, (B2, K2), dtype=jnp.float32)
    y2 = jax.block_until_ready(
        noisy_linear_forward(x2, *ops2, out_features=N2,
                             tm=plan2["tm"], tn=plan2["tn"], tk=plan2["tk"]))
    assert y2.shape == (B2, N2)
    assert jnp.allclose(y2, _reference_bf16(x2, *params2), atol=2e-3, rtol=2e-3)
    assert jnp.allclose(y2, _reference_f32(x2, *params2), atol=5e-2, rtol=5e-2)

    print("KERNEL_OK")
</pallas_src>

<mosaic_0001>
module attributes {stable_mosaic.version = 11 : i64} {
  func.func @noisy_linear_kernel(%arg0: i32, %arg1: i32, %arg2: i32, %arg3: memref<8x128xf32, #tpu.memory_space<vmem>>, %arg4: memref<1x128xf32, #tpu.memory_space<vmem>>, %arg5: memref<128x128xbf16, #tpu.memory_space<vmem>>, %arg6: memref<128x128xbf16, #tpu.memory_space<vmem>>, %arg7: memref<1x128xf32, #tpu.memory_space<vmem>>, %arg8: memref<1x128xf32, #tpu.memory_space<vmem>>, %arg9: memref<8x128xf32, #tpu.memory_space<vmem>>) attributes {dimension_semantics = [#tpu.dimension_semantics<parallel>, #tpu.dimension_semantics<parallel>, #tpu.dimension_semantics<arbitrary>], iteration_bounds = array<i64: 1, 1, 1>, scalar_prefetch = 0 : i64, scratch_operands = 0 : i64, tpu.core_type = #tpu.core_type<tc>, window_params = [{transform_indices = @transform_0, window_bounds = array<i64: 8, 128>}, {transform_indices = @transform_1, window_bounds = array<i64: 1, 128>}, {transform_indices = @transform_2, window_bounds = array<i64: 128, 128>}, {transform_indices = @transform_3, window_bounds = array<i64: 128, 128>}, {transform_indices = @transform_4, window_bounds = array<i64: 1, 128>}, {transform_indices = @transform_5, window_bounds = array<i64: 1, 128>}, {transform_indices = @transform_6, window_bounds = array<i64: 8, 128>}]} {
    %c0_i32 = arith.constant 0 : i32
    %0 = arith.cmpi eq, %arg2, %c0_i32 : i32
    %1 = arith.extui %0 : i1 to i32
    %c0_i32_0 = arith.constant 0 : i32
    %2 = arith.cmpi ne, %1, %c0_i32_0 : i32
    scf.if %2 {
      %c0_15 = arith.constant 0 : index
      %c0_16 = arith.constant 0 : index
      %20 = vector.load %arg8[%c0_15, %c0_16] : memref<1x128xf32, #tpu.memory_space<vmem>>, vector<1x128xf32>
      %21 = vector.shape_cast %20 : vector<1x128xf32> to vector<1x128xf32>
      %22 = vector.broadcast %21 : vector<1x128xf32> to vector<8x128xf32>
      %c0_17 = arith.constant 0 : index
      %c0_18 = arith.constant 0 : index
      %23 = vector.load %arg9[%c0_17, %c0_18] : memref<8x128xf32, #tpu.memory_space<vmem>>, vector<8x128xf32>
      tpu.vector_store %arg9[%c0_17, %c0_18], %22 {strides = array<i32>} : memref<8x128xf32, #tpu.memory_space<vmem>>, vector<8x128xf32>,
    } else {
    }
    %c0 = arith.constant 0 : index
    %c0_1 = arith.constant 0 : index
    %3 = vector.load %arg3[%c0, %c0_1] : memref<8x128xf32, #tpu.memory_space<vmem>>, vector<8x128xf32>
    %4 = arith.truncf %3 : vector<8x128xf32> to vector<8x128xbf16>
    %c0_2 = arith.constant 0 : index
    %c0_3 = arith.constant 0 : index
    %5 = vector.load %arg5[%c0_2, %c0_3] : memref<128x128xbf16, #tpu.memory_space<vmem>>, vector<128x128xbf16>
    %cst = arith.constant dense<0.000000e+00> : vector<8x128xf32>
    %6 = tpu.matmul %4, %5, %cst {dimension_numbers = #tpu.dot_dimension_numbers<[1], [0], [0], [1], [0, 0, 1, 1], [], []>} : vector<8x128xbf16>, vector<128x128xbf16>, vector<8x128xf32> -> vector<8x128xf32>
    %c0_4 = arith.constant 0 : index
    %c0_5 = arith.constant 0 : index
    %7 = vector.load %arg4[%c0_4, %c0_5] : memref<1x128xf32, #tpu.memory_space<vmem>>, vector<1x128xf32>
    %8 = vector.broadcast %7 : vector<1x128xf32> to vector<8x128xf32>
    %9 = arith.mulf %3, %8 : vector<8x128xf32>
    %10 = arith.truncf %9 : vector<8x128xf32> to vector<8x128xbf16>
    %c0_6 = arith.constant 0 : index
    %c0_7 = arith.constant 0 : index
    %11 = vector.load %arg6[%c0_6, %c0_7] : memref<128x128xbf16, #tpu.memory_space<vmem>>, vector<128x128xbf16>
    %cst_8 = arith.constant dense<0.000000e+00> : vector<8x128xf32>
    %12 = tpu.matmul %10, %11, %cst_8 {dimension_numbers = #tpu.dot_dimension_numbers<[1], [0], [0], [1], [0, 0, 1, 1], [], []>} : vector<8x128xbf16>, vector<128x128xbf16>, vector<8x128xf32> -> vector<8x128xf32>
    %c0_9 = arith.constant 0 : index
    %c0_10 = arith.constant 0 : index
    %13 = vector.load %arg9[%c0_9, %c0_10] : memref<8x128xf32, #tpu.memory_space<vmem>>, vector<8x128xf32>
    %c0_11 = arith.constant 0 : index
    %c0_12 = arith.constant 0 : index
    %14 = vector.load %arg7[%c0_11, %c0_12] : memref<1x128xf32, #tpu.memory_space<vmem>>, vector<1x128xf32>
    %15 = vector.broadcast %14 : vector<1x128xf32> to vector<8x128xf32>
    %16 = arith.mulf %12, %15 : vector<8x128xf32>
    %17 = arith.addf %6, %16 : vector<8x128xf32>
    %18 = arith.addf %13, %17 : vector<8x128xf32>
    %c0_13 = arith.constant 0 : index
    %c0_14 = arith.constant 0 : index
    %19 = vector.load %arg9[%c0_13, %c0_14] : memref<8x128xf32, #tpu.memory_space<vmem>>, vector<8x128xf32>
    tpu.vector_store %arg9[%c0_13, %c0_14], %18 {strides = array<i32>} : memref<8x128xf32, #tpu.memory_space<vmem>>, vector<8x128xf32>,
    return
  }
  func.func @transform_0(%arg0: i32, %arg1: i32, %arg2: i32) -> (i32, i32) {
    %c0_i32 = arith.constant 0 : i32
    return %arg0, %arg2 : i32, i32
  }
  func.func @transform_1(%arg0: i32, %arg1: i32, %arg2: i32) -> (i32, i32) {
    %c0_i32 = arith.constant 0 : i32
    %c0_i32_0 = arith.constant 0 : i32
    return %c0_i32, %arg2 : i32, i32
  }
  func.func @transform_2(%arg0: i32, %arg1: i32, %arg2: i32) -> (i32, i32) {
    %c0_i32 = arith.constant 0 : i32
    return %arg2, %arg1 : i32, i32
  }
  func.func @transform_3(%arg0: i32, %arg1: i32, %arg2: i32) -> (i32, i32) {
    %c0_i32 = arith.constant 0 : i32
    return %arg2, %arg1 : i32, i32
  }
  func.func @transform_4(%arg0: i32, %arg1: i32, %arg2: i32) -> (i32, i32) {
    %c0_i32 = arith.constant 0 : i32
    %c0_i32_0 = arith.constant 0 : i32
    return %c0_i32, %arg1 : i32, i32
  }
  func.func @transform_5(%arg0: i32, %arg1: i32, %arg2: i32) -> (i32, i32) {
    %c0_i32 = arith.constant 0 : i32
    %c0_i32_0 = arith.constant 0 : i32
    return %c0_i32, %arg1 : i32, i32
  }
  func.func @transform_6(%arg0: i32, %arg1: i32, %arg2: i32) -> (i32, i32) {
    %c0_i32 = arith.constant 0 : i32
    return %arg0, %arg1 : i32, i32
  }
}

</mosaic_0001>

<llo_original>
// kernel: noisy_linear_forward.1
$region0: #{noisy_linear_forward.1}
  #allocation0 [shape = 'u32[]', space=smem, size = 0x4, offset = 0x4, fixed_abs, tag = 'smem constant byte address 0x4 - core index']
  #allocation1 [shape = 'u32[144,128]{1,0:T(1,128)}', space=vmem, size = 0x12000, scoped, tag = 'internal scratch']
  %s0 = inlined_call_operand.vmem [shape: f32[8,128], index: 0, kind: input, shape index: {}]
  %s1 = inlined_call_operand.vmem [shape: f32[1,128], index: 1, kind: input, shape index: {}]
  %s2 = inlined_call_operand.hbm [shape: bf16[128,128], index: 2, kind: input, shape index: {}]
  %s3 = inlined_call_operand.hbm [shape: bf16[128,128], index: 3, kind: input, shape index: {}]
  %s4 = inlined_call_operand.vmem [shape: f32[1,128], index: 4, kind: input, shape index: {}]
  %s5 = inlined_call_operand.vmem [shape: f32[1,128], index: 5, kind: input, shape index: {}]
  %s6 = inlined_call_operand.hbm [shape: f32[8,128], index: 6, kind: output, shape index: {}]
  %s7 = sld [smem:[#allocation0]]
  $region46: #{noisy_linear_forward.1} parent=0
    _
  %s9 = ssub.s32 1, %s7
  %s10 = scalar_select 0, %s9, %s7
  $region1: #{noisy_linear_forward.1} parent=0
    #allocation2 [shape = 'u8[32768]{0}', space=vmem, size = 0x8000, scoped, tag = 'input window, operand 2, single buffered']
    #allocation3 [shape = 's32[1]{0}', space=sflag, size = 0x4, scoped, tag = 'scoped memory for noisy_linear_forward.1']
    #allocation4 [shape = 's32[1]{0}', space=sflag, size = 0x4, scoped, tag = 'scoped memory for noisy_linear_forward.1']
    #allocation5 [shape = 'u8[32768]{0}', space=vmem, size = 0x8000, scoped, tag = 'input window, operand 3, single buffered']
    #allocation6 [shape = 's32[1]{0}', space=sflag, size = 0x4, scoped, tag = 'scoped memory for noisy_linear_forward.1']
    #allocation7 [shape = 'u8[4096]{0}', space=vmem, size = 0x1000, scoped, tag = 'output window, operand 0, single buffered']
    %11 = vsyncpa [#allocation3], 0
    %12 = vsyncpa [#allocation6], 0
    %13 = vsyncpa [#allocation4], 0
    // Predicated region
    $region2: #{noisy_linear_forward.1} parent=1 // pred_check
      _
    $region3: #{noisy_linear_forward.1} parent=1 // pred_check_branch
      %15 = sbr.rel (0) target = $region5
    $region4: #{noisy_linear_forward.1} parent=1 // pred_region
      _
    $region5: #{noisy_linear_forward.1} parent=1 // pred_fallthru
      _
    // Predicated region
    $region6: #{noisy_linear_forward.1} parent=1 // pred_check
      _
    $region7: #{noisy_linear_forward.1} parent=1 // pred_check_branch
      %17 = sbr.rel (0) target = $region9
    $region8: #{noisy_linear_forward.1} parent=1 // pred_region
      _
    $region9: #{noisy_linear_forward.1} parent=1 // pred_fallthru
      _
    // Predicated region
    $region10: #{noisy_linear_forward.1} parent=1 // pred_check
      _
    $region11: #{noisy_linear_forward.1} parent=1 // pred_check_branch
      %19 = sbr.rel (0) target = $region13
    $region12: #{noisy_linear_forward.1} parent=1 // pred_region
      %s21 = ssub.s32 1024, 1024
      %22 = vsyncadd [#allocation3], %s21
      %s23 = sshll.u32 [#allocation2], 4
      %s24 = int_to_ptr.vmem [resolvable:$true] %s23
      %29 = dma.hbm_to_vmem [thread:$0]  %s2, 1024, %s24, [#allocation3], 64, 64, 4
    $region13: #{noisy_linear_forward.1} parent=1 // pred_fallthru
      _
    // Predicated region
    $region14: #{noisy_linear_forward.1} parent=1 // pred_check
      _
    $region15: #{noisy_linear_forward.1} parent=1 // pred_check_branch
      %31 = sbr.rel (0) target = $region17
    $region16: #{noisy_linear_forward.1} parent=1 // pred_region
      %s33 = ssub.s32 1024, 1024
      %34 = vsyncadd [#allocation6], %s33
      %s35 = sshll.u32 [#allocation5], 4
      %s36 = int_to_ptr.vmem [resolvable:$true] %s35
      %41 = dma.hbm_to_vmem [thread:$0]  %s3, 1024, %s36, [#allocation6], 64, 64, 4
    $region17: #{noisy_linear_forward.1} parent=1 // pred_fallthru
      _
    // Predicated region
    $region18: #{noisy_linear_forward.1} parent=1 // pred_check
      _
    $region19: #{noisy_linear_forward.1} parent=1 // pred_check_branch
      %43 = sbr.rel (0) target = $region21
    $region20: #{noisy_linear_forward.1} parent=1 // pred_region
      _
    $region21: #{noisy_linear_forward.1} parent=1 // pred_fallthru
      _
    // Predicated region
    $region22: #{noisy_linear_forward.1} parent=1 // pred_check
      _
    $region23: #{noisy_linear_forward.1} parent=1 // pred_check_branch
      %45 = sbr.rel (0) target = $region25
    $region24: #{noisy_linear_forward.1} parent=1 // pred_region
      _
    $region25: #{noisy_linear_forward.1} parent=1 // pred_fallthru
      _
    // Predicated region
    $region26: #{noisy_linear_forward.1} parent=1 // pred_check
      _
    $region27: #{noisy_linear_forward.1} parent=1 // pred_check_branch
      %47 = sbr.rel (0) target = $region29
    $region28: #{noisy_linear_forward.1} parent=1 // pred_region
      %48 = dma.done [#allocation3], 1024
    $region29: #{noisy_linear_forward.1} parent=1 // pred_fallthru
      _
    // Predicated region
    $region30: #{noisy_linear_forward.1} parent=1 // pred_check
      _
    $region31: #{noisy_linear_forward.1} parent=1 // pred_check_branch
      %50 = sbr.rel (0) target = $region33
    $region32: #{noisy_linear_forward.1} parent=1 // pred_region
      %51 = dma.done [#allocation6], 1024
    $region33: #{noisy_linear_forward.1} parent=1 // pred_fallthru
      _
    %p53 = scmp.eq.s32.totalorder 0, 0
    // Predicated region
    $region34: #{noisy_linear_forward.1} parent=1 // pred_check
      %p54 = pneg %p53
    $region35: #{noisy_linear_forward.1} parent=1 // pred_check_branch
      %56 = sbr.rel (%p54) target = $region37
    $region36: #{noisy_linear_forward.1} parent=1 // pred_region
      %v57 = vld [vmem:[%s5] sm:$0x1]
      %v59 = vlaneseq
      %v60 = vshrl.u32 %v59, 7
      %v61 = vsub.s32 0, %v60
      %v62 = vrot.slane %v57, %v61
      %64 = vst [vmem:[#allocation7] sm:$0xff] %v62
    $region37: #{noisy_linear_forward.1} parent=1 // pred_fallthru
      _
    %v65 = vld [vmem:[%s0] sm:$0xff]
    %v66 = vpack.c.bf16 %v65, %v65
    %v67 = vld [vmem:[#allocation2] sm:$0xf]
    %v68 = vld [vmem:[#allocation2 + $0x4] sm:$0xf]
    %v69 = vld [vmem:[#allocation2 + $0x8] sm:$0xf]
    %v70 = vld [vmem:[#allocation2 + $0xc] sm:$0xf]
    %v71 = vld [vmem:[#allocation2 + $0x10] sm:$0xf]
    %v72 = vld [vmem:[#allocation2 + $0x14] sm:$0xf]
    %v73 = vld [vmem:[#allocation2 + $0x18] sm:$0xf]
    %v74 = vld [vmem:[#allocation2 + $0x1c] sm:$0xf]
    %v75 = vld [vmem:[#allocation2 + $0x20] sm:$0xf]
    %v76 = vld [vmem:[#allocation2 + $0x24] sm:$0xf]
    %v77 = vld [vmem:[#allocation2 + $0x28] sm:$0xf]
    %v78 = vld [vmem:[#allocation2 + $0x2c] sm:$0xf]
    %v79 = vld [vmem:[#allocation2 + $0x30] sm:$0xf]
    %v80 = vld [vmem:[#allocation2 + $0x34] sm:$0xf]
    %v81 = vld [vmem:[#allocation2 + $0x38] sm:$0xf]
    %v82 = vld [vmem:[#allocation2 + $0x3c] sm:$0xf]
    %v83 = vld [vmem:[%s1] sm:$0x1]
    %v85 = vlaneseq
    %v86 = vshrl.u32 %v85, 7
    %v87 = vsub.s32 0, %v86
    %v88 = vrot.slane %v83, %v87
    %v90 = vmul.f32 %v65, %v88
    %v91 = vpack.c.bf16 %v90, %v90
    %v92 = vld [vmem:[#allocation5] sm:$0xf]
    %v93 = vld [vmem:[#allocation5 + $0x4] sm:$0xf]
    %v94 = vld [vmem:[#allocation5 + $0x8] sm:$0xf]
    %v95 = vld [vmem:[#allocation5 + $0xc] sm:$0xf]
    %v96 = vld [vmem:[#allocation5 + $0x10] sm:$0xf]
    %v97 = vld [vmem:[#allocation5 + $0x14] sm:$0xf]
    %v98 = vld [vmem:[#allocation5 + $0x18] sm:$0xf]
    %v99 = vld [vmem:[#allocation5 + $0x1c] sm:$0xf]
    %v100 = vld [vmem:[#allocation5 + $0x20] sm:$0xf]
    %v101 = vld [vmem:[#allocation5 + $0x24] sm:$0xf]
    %v102 = vld [vmem:[#allocation5 + $0x28] sm:$0xf]
    %v103 = vld [vmem:[#allocation5 + $0x2c] sm:$0xf]
    %v104 = vld [vmem:[#allocation5 + $0x30] sm:$0xf]
    %v105 = vld [vmem:[#allocation5 + $0x34] sm:$0xf]
    %v106 = vld [vmem:[#allocation5 + $0x38] sm:$0xf]
    %v107 = vld [vmem:[#allocation5 + $0x3c] sm:$0xf]
    %v124 = vunpack.c.l.b16 %v92
    %v125 = vunpack.c.l.b16 %v93
    %v126 = vunpack.c.l.b16 %v94
    %v127 = vunpack.c.l.b16 %v95
    %v128 = vunpack.c.l.b16 %v96
    %v129 = vunpack.c.l.b16 %v97
    %v130 = vunpack.c.l.b16 %v98
    %v131 = vunpack.c.l.b16 %v99
    %v132 = vunpack.c.l.b16 %v100
    %v133 = vunpack.c.l.b16 %v101
    %v134 = vunpack.c.l.b16 %v102
    %v135 = vunpack.c.l.b16 %v103
    %v136 = vunpack.c.l.b16 %v104
    %v137 = vunpack.c.l.b16 %v105
    %v138 = vunpack.c.l.b16 %v106
    %v139 = vunpack.c.l.b16 %v107
    %v140 = vpack.c.b16 %v125, %v124
    %v141 = vpack.c.b16 %v127, %v126
    %v142 = vpack.c.b16 %v129, %v128
    %v143 = vpack.c.b16 %v131, %v130
    %v144 = vpack.c.b16 %v133, %v132
    %v145 = vpack.c.b16 %v135, %v134
    %v146 = vpack.c.b16 %v137, %v136
    %v147 = vpack.c.b16 %v139, %v138
    %156 = vmatprep.subr.bf16.mxu0 0
    %157 = vmatpush1.bf16.msra.mxu0 %v147
    %158 = vmatprep.subr.bf16.mxu0 0
    %159 = vmatpush1.bf16.msra.mxu0 %v146
    %160 = vmatprep.subr.bf16.mxu0 0
    %161 = vmatpush1.bf16.msra.mxu0 %v145
    %162 = vmatprep.subr.bf16.mxu0 0
    %163 = vmatpush1.bf16.msra.mxu0 %v144
    %164 = vmatprep.subr.bf16.mxu0 0
    %165 = vmatpush1.bf16.msra.mxu0 %v143
    %166 = vmatprep.subr.bf16.mxu0 0
    %167 = vmatpush1.bf16.msra.mxu0 %v142
    %168 = vmatprep.subr.bf16.mxu0 0
    %169 = vmatpush1.bf16.msra.mxu0 %v141
    %170 = vmatprep.subr.bf16.mxu0 0
    %171 = vmatpush1.bf16.msra.mxu0 %v140
    %172 = vmatprep.subr.bf16.mxu0 0
    %173 = vmatpush2.bf16.msra.mxu0 0
    %174 = vmatprep.subr.bf16.mxu0 0
    %175 = vmatpush2.bf16.msra.mxu0 0
    %176 = vmatprep.subr.bf16.mxu0 0
    %177 = vmatpush2.bf16.msra.mxu0 0
    %178 = vmatprep.subr.bf16.mxu0 0
    %179 = vmatpush2.bf16.msra.mxu0 0
    %180 = vmatprep.subr.bf16.mxu0 0
    %181 = vmatpush2.bf16.msra.mxu0 0
    %182 = vmatprep.subr.bf16.mxu0 0
    %183 = vmatpush2.bf16.msra.mxu0 0
    %184 = vmatprep.subr.bf16.mxu0 0
    %185 = vmatpush2.bf16.msra.mxu0 0
    %186 = vmatprep.subr.bf16.mxu0 0
    %187 = vmatpush2.bf16.msra.mxu0 0
    %188 = vmatprep.mubr.bf16.mxu0 0
    %189 = vmatmul.mubr.bf16.gmra.mxu0 %v91
    %v190 = vpop.f32.mrf.mxu0
    %v191 = vadd.f32 0.0, %v190
    %v192 = vpop.f32.mrf.mxu0
    %v193 = vpop.f32.mrf.mxu0
    %v194 = vpop.f32.mrf.mxu0
    %195 = vdwg.mxu0
    %v196 = vld [vmem:[#allocation7] sm:$0xff]
    %v197 = vld [vmem:[%s4] sm:$0x1]
    %v199 = vlaneseq
    %v200 = vshrl.u32 %v199, 7
    %v201 = vsub.s32 0, %v200
    %v202 = vrot.slane %v197, %v201
    %v204 = vmul.f32 %v191, %v202
    %v221 = vunpack.c.l.b16 %v67
    %v222 = vunpack.c.l.b16 %v68
    %v223 = vunpack.c.l.b16 %v69
    %v224 = vunpack.c.l.b16 %v70
    %v225 = vunpack.c.l.b16 %v71
    %v226 = vunpack.c.l.b16 %v72
    %v227 = vunpack.c.l.b16 %v73
    %v228 = vunpack.c.l.b16 %v74
    %v229 = vunpack.c.l.b16 %v75
    %v230 = vunpack.c.l.b16 %v76
    %v231 = vunpack.c.l.b16 %v77
    %v232 = vunpack.c.l.b16 %v78
    %v233 = vunpack.c.l.b16 %v79
    %v234 = vunpack.c.l.b16 %v80
    %v235 = vunpack.c.l.b16 %v81
    %v236 = vunpack.c.l.b16 %v82
    %v237 = vpack.c.b16 %v222, %v221
    %v238 = vpack.c.b16 %v224, %v223
    %v239 = vpack.c.b16 %v226, %v225
    %v240 = vpack.c.b16 %v228, %v227
    %v241 = vpack.c.b16 %v230, %v229
    %v242 = vpack.c.b16 %v232, %v231
    %v243 = vpack.c.b16 %v234, %v233
    %v244 = vpack.c.b16 %v236, %v235
    %253 = vmatprep.subr.bf16.mxu0 0
    %254 = vmatpush1.bf16.msra.mxu0 %v244
    %255 = vmatprep.subr.bf16.mxu0 0
    %256 = vmatpush1.bf16.msra.mxu0 %v243
    %257 = vmatprep.subr.bf16.mxu0 0
    %258 = vmatpush1.bf16.msra.mxu0 %v242
    %259 = vmatprep.subr.bf16.mxu0 0
    %260 = vmatpush1.bf16.msra.mxu0 %v241
    %261 = vmatprep.subr.bf16.mxu0 0
    %262 = vmatpush1.bf16.msra.mxu0 %v240
    %263 = vmatprep.subr.bf16.mxu0 0
    %264 = vmatpush1.bf16.msra.mxu0 %v239
    %265 = vmatprep.subr.bf16.mxu0 0
    %266 = vmatpush1.bf16.msra.mxu0 %v238
    %267 = vmatprep.subr.bf16.mxu0 0
    %268 = vmatpush1.bf16.msra.mxu0 %v237
    %269 = vmatprep.subr.bf16.mxu0 0
    %270 = vmatpush2.bf16.msra.mxu0 0
    %271 = vmatprep.subr.bf16.mxu0 0
    %272 = vmatpush2.bf16.msra.mxu0 0
    %273 = vmatprep.subr.bf16.mxu0 0
    %274 = vmatpush2.bf16.msra.mxu0 0
    %275 = vmatprep.subr.bf16.mxu0 0
    %276 = vmatpush2.bf16.msra.mxu0 0
    %277 = vmatprep.subr.bf16.mxu0 0
    %278 = vmatpush2.bf16.msra.mxu0 0
    %279 = vmatprep.subr.bf16.mxu0 0
    %280 = vmatpush2.bf16.msra.mxu0 0
    %281 = vmatprep.subr.bf16.mxu0 0
    %282 = vmatpush2.bf16.msra.mxu0 0
    %283 = vmatprep.subr.bf16.mxu0 0
    %284 = vmatpush2.bf16.msra.mxu0 0
    %285 = vmatprep.mubr.bf16.mxu0 0
    %286 = vmatmul.mubr.bf16.gmra.mxu0 %v66
    %v287 = vpop.f32.mrf.mxu0
    %v288 = vadd.f32 %v204, %v287
    %v289 = vpop.f32.mrf.mxu0
    %v290 = vpop.f32.mrf.mxu0
    %v291 = vpop.f32.mrf.mxu0
    %292 = vdwg.mxu0
    %v293 = vadd.f32 %v196, %v288
    %294 = vst [vmem:[#allocation7] sm:$0xff] %v293
    // Predicated region
    $region38: #{noisy_linear_forward.1} parent=1 // pred_check
      _
    $region39: #{noisy_linear_forward.1} parent=1 // pred_check_branch
      %296 = sbr.rel (0) target = $region41
    $region40: #{noisy_linear_forward.1} parent=1 // pred_region
      %s298 = ssub.s32 128, 128
      %299 = vsyncadd [#allocation4], %s298
      %s301 = sshll.u32 [#allocation7], 4
      %s302 = int_to_ptr.vmem [resolvable:$true] %s301
      %304 = dma.vmem_to_hbm [thread:$0]  %s302, 128, %s6, [#allocation4]
    $region41: #{noisy_linear_forward.1} parent=1 // pred_fallthru
      _
    // Predicated region
    $region42: #{noisy_linear_forward.1} parent=1 // pred_check
      _
    $region43: #{noisy_linear_forward.1} parent=1 // pred_check_branch
      %306 = sbr.rel (0) target = $region45
    $region44: #{noisy_linear_forward.1} parent=1 // pred_region
      %307 = dma.done [#allocation4], 128
    $region45: #{noisy_linear_forward.1} parent=1 // pred_fallthru
      _
    %308 = vsyncpa [#allocation3], 1
    %309 = vsyncpa [#allocation6], 1
    %310 = vsyncpa [#allocation4], 1

</llo_original>
